<compile_context>
chip_gen: v7x
topology: tpu7x:2x2x1
jax: 0.10.0
libtpu: 0.0.40
codegen_flags: <defaults>
</compile_context>

<pallas_src>
import functools

import jax
import jax.numpy as jnp
from jax.experimental import pallas as pl
from jax.experimental.pallas import tpu as pltpu


def _round_up(x, m):
    return ((x + m - 1) // m) * m


def dqn_kernel(x_ref,
               w1_ref, b1_ref,
               w2_ref, b2_ref,
               w3_ref, b3_ref,
               w4_ref, b4_ref,
               o_ref):
    """Fused 4-layer MLP: relu(fc1) -> relu(fc2) -> relu(fc3) -> fc4.

    Matmuls run on the MXU with fp32 accumulation; bias-add / ReLU stay fp32 on
    the VPU.  Activations are cast to the weight dtype before each dot, so bf16
    weights drive the bf16-native MXU path on every TPU generation.
    """
    wdt = w1_ref.dtype
    x = x_ref[...].astype(wdt)

    h = jnp.dot(x, w1_ref[...], preferred_element_type=jnp.float32) + b1_ref[...]
    h = jnp.maximum(h, 0.0).astype(wdt)

    h = jnp.dot(h, w2_ref[...], preferred_element_type=jnp.float32) + b2_ref[...]
    h = jnp.maximum(h, 0.0).astype(wdt)

    h = jnp.dot(h, w3_ref[...], preferred_element_type=jnp.float32) + b3_ref[...]
    h = jnp.maximum(h, 0.0).astype(wdt)

    o_ref[...] = (jnp.dot(h, w4_ref[...], preferred_element_type=jnp.float32)
                  + b4_ref[...]).astype(o_ref.dtype)


def _choose_tile_b(B, tile_b):
    """Batch tile: multiple of 8 (fp32 sublane); for auto mode pick an even,
    >=2-step grid when B allows so v7x's two TensorCores split the work evenly
    (M streams through the MXU, so only sublane-8 alignment matters for M)."""
    if tile_b is not None:
        return min(tile_b, _round_up(B, 8))
    if B <= 8:
        return 8
    if B <= 2048:
        return max(8, _round_up(pl.cdiv(B, 2), 8))
    steps = _round_up(pl.cdiv(B, 1024), 2)        # even step count, <=~1024 rows/step
    return _round_up(pl.cdiv(B, steps), 8)


@functools.partial(jax.jit, static_argnames=("tile_b",))
def dqn_forward(x, params, tile_b=None):
    """x: (B, input_dim) float32.

    params: dict of weights w1..w4 stored (in, out) and biases b1..b4 stored
    (1, out).  Weights may be bfloat16 (recommended default, all generations) or
    float32; biases stay float32.  tile_b=None picks an even >=2-step grid
    automatically (v7x core balance); an explicit tile_b is clamped to the batch.
    """
    B, K = x.shape
    h1 = params["w1"].shape[1]
    h2 = params["w2"].shape[1]
    h3 = params["w3"].shape[1]
    out_dim = params["w4"].shape[1]

    # Lane-dense output: pad the last layer's columns to a multiple of 128 so the
    # output writeback is unmasked; slice back to out_dim after the pallas_call.
    n_pad = _round_up(out_dim, 128)
    w4, b4 = params["w4"], params["b4"]
    if n_pad != out_dim:
        w4 = jnp.pad(w4, ((0, 0), (0, n_pad - out_dim)))
        b4 = jnp.pad(b4, ((0, 0), (0, n_pad - out_dim)))

    tile_b = _choose_tile_b(B, tile_b)
    grid = (pl.cdiv(B, tile_b),)

    def x_map(i):
        return (i, 0)

    def rep_map(i):
        # Constant block index => weights/biases stay resident in VMEM; their HBM
        # DMAs are not re-issued per grid step.
        return (0, 0)

    full = lambda arr: pl.BlockSpec(arr.shape, rep_map)

    operands = (x,
                params["w1"], params["b1"],
                params["w2"], params["b2"],
                params["w3"], params["b3"],
                w4, b4)

    flops = 2 * B * (K * h1 + h1 * h2 + h2 * h3 + h3 * out_dim)
    bytes_accessed = (x.size * x.dtype.itemsize                    # unpadded x
                      + sum(int(t.size) * t.dtype.itemsize for t in operands[1:])
                      + B * n_pad * 4)

    out = pl.pallas_call(
        dqn_kernel,
        out_shape=jax.ShapeDtypeStruct((B, n_pad), jnp.float32),
        grid_spec=pltpu.PrefetchScalarGridSpec(
            num_scalar_prefetch=0,
            grid=grid,
            in_specs=[
                # x block: last dim == full array dim (no HBM-side K padding).
                pl.BlockSpec((tile_b, K), x_map),
                full(params["w1"]), full(params["b1"]),
                full(params["w2"]), full(params["b2"]),
                full(params["w3"]), full(params["b3"]),
                full(w4), full(b4),
            ],
            out_specs=pl.BlockSpec((tile_b, n_pad), x_map),
        ),
        compiler_params=pltpu.CompilerParams(
            dimension_semantics=("parallel",)),   # grid steps shard across v7x cores
        cost_estimate=pl.CostEstimate(
            flops=flops, transcendentals=0, bytes_accessed=bytes_accessed),
    )(*operands)

    if n_pad != out_dim:
        out = out[:, :out_dim]
    return out


def init_dqn_params(key, input_dim, output_dim):
    """Deterministic init matching torch nn.Linear shapes (stored as (in, out))."""
    dims = [(input_dim, 256), (256, 256), (256, 128), (128, output_dim)]
    params = {}
    for idx, (fan_in, fan_out) in enumerate(dims, start=1):
        key, kw, kb = jax.random.split(key, 3)
        bound = 1.0 / jnp.sqrt(jnp.float32(fan_in))
        params[f"w{idx}"] = jax.random.uniform(
            kw, (fan_in, fan_out), jnp.float32, minval=-bound, maxval=bound)
        params[f"b{idx}"] = jax.random.uniform(
            kb, (1, fan_out), jnp.float32, minval=-bound, maxval=bound)
    return params


def cast_weights(params, weight_dtype=jnp.bfloat16):
    """Cast the matmul weights (not biases) to `weight_dtype`.

    bf16 is the recommended default on v5e/v6e/v7x: the MXU is bf16-native on all
    three, dots accumulate in fp32, and bias-add/ReLU stay fp32 on the VPU.  Note
    inter-layer activations are also carried in the weight dtype inside the
    kernel, so bf16 quantization error compounds mildly across the 4 layers.
    """
    out = dict(params)
    for idx in (1, 2, 3, 4):
        out[f"w{idx}"] = params[f"w{idx}"].astype(weight_dtype)
    return out


def dqn_reference(x, params):
    h = jnp.maximum(x @ params["w1"] + params["b1"], 0.0)
    h = jnp.maximum(h @ params["w2"] + params["b2"], 0.0)
    h = jnp.maximum(h @ params["w3"] + params["b3"], 0.0)
    return h @ params["w4"] + params["b4"]


if __name__ == "__main__":
    key = jax.random.PRNGKey(0)

    input_dim, output_dim = 16, 4
    params = init_dqn_params(key, input_dim, output_dim)
    params_bf16 = cast_weights(params, jnp.bfloat16)   # default recommended path

    # Small (single-env rollout style) batch -> 1 grid step.
    key, kx = jax.random.split(key)
    x_small = jax.random.normal(kx, (8, input_dim), jnp.float32)
    ref_small = dqn_reference(x_small, params)

    out_small_fp32 = jax.block_until_ready(dqn_forward(x_small, params))
    assert out_small_fp32.shape == (8, output_dim)
    assert jnp.allclose(out_small_fp32, ref_small, atol=1e-4, rtol=1e-4), \
        "fp32 small-batch mismatch"

    out_small_bf16 = jax.block_until_ready(dqn_forward(x_small, params_bf16))
    assert jnp.allclose(out_small_bf16, ref_small, atol=1e-1, rtol=1e-1), \
        "bf16 small-batch mismatch"

    # Training-sized batch, B deliberately not a multiple of 8: auto tile picks an
    # even 2-step grid (v7x core balance) and masks the partial last-tile writeback.
    key, kx2 = jax.random.split(key)
    x_big = jax.random.normal(kx2, (300, input_dim), jnp.float32)
    ref_big = dqn_reference(x_big, params)

    out_big_bf16 = jax.block_until_ready(dqn_forward(x_big, params_bf16))
    assert out_big_bf16.shape == (300, output_dim)
    assert jnp.allclose(out_big_bf16, ref_big, atol=1e-1, rtol=1e-1), \
        "bf16 large-batch mismatch"

    out_big_fp32 = jax.block_until_ready(dqn_forward(x_big, params))
    assert jnp.allclose(out_big_fp32, ref_big, atol=1e-4, rtol=1e-4), \
        "fp32 large-batch mismatch"

    # Explicit tile override still works (clamped, multiple-of-8 tiles).
    out_big_t128 = jax.block_until_ready(dqn_forward(x_big, params_bf16, tile_b=128))
    assert jnp.allclose(out_big_t128, ref_big, atol=1e-1, rtol=1e-1), \
        "explicit-tile mismatch"

    print("KERNEL_OK")
</pallas_src>

<mosaic_0001>
module attributes {stable_mosaic.version = 11 : i64} {
  func.func @dqn_kernel(%arg0: i32, %arg1: memref<8x16xf32, #tpu.memory_space<vmem>>, %arg2: memref<16x256xf32, #tpu.memory_space<vmem>>, %arg3: memref<1x256xf32, #tpu.memory_space<vmem>>, %arg4: memref<256x256xf32, #tpu.memory_space<vmem>>, %arg5: memref<1x256xf32, #tpu.memory_space<vmem>>, %arg6: memref<256x128xf32, #tpu.memory_space<vmem>>, %arg7: memref<1x128xf32, #tpu.memory_space<vmem>>, %arg8: memref<128x128xf32, #tpu.memory_space<vmem>>, %arg9: memref<1x128xf32, #tpu.memory_space<vmem>>, %arg10: memref<8x128xf32, #tpu.memory_space<vmem>>) attributes {dimension_semantics = [#tpu.dimension_semantics<parallel>], iteration_bounds = array<i64: 1>, scalar_prefetch = 0 : i64, scratch_operands = 0 : i64, tpu.core_type = #tpu.core_type<tc>, window_params = [{transform_indices = @transform_0, window_bounds = array<i64: 8, 16>}, {pipeline_mode = #tpu.pipeline_mode<synchronous>, transform_indices = @transform_1, window_bounds = array<i64: 16, 256>}, {pipeline_mode = #tpu.pipeline_mode<synchronous>, transform_indices = @transform_2, window_bounds = array<i64: 1, 256>}, {pipeline_mode = #tpu.pipeline_mode<synchronous>, transform_indices = @transform_3, window_bounds = array<i64: 256, 256>}, {pipeline_mode = #tpu.pipeline_mode<synchronous>, transform_indices = @transform_4, window_bounds = array<i64: 1, 256>}, {pipeline_mode = #tpu.pipeline_mode<synchronous>, transform_indices = @transform_5, window_bounds = array<i64: 256, 128>}, {pipeline_mode = #tpu.pipeline_mode<synchronous>, transform_indices = @transform_6, window_bounds = array<i64: 1, 128>}, {pipeline_mode = #tpu.pipeline_mode<synchronous>, transform_indices = @transform_7, window_bounds = array<i64: 128, 128>}, {pipeline_mode = #tpu.pipeline_mode<synchronous>, transform_indices = @transform_8, window_bounds = array<i64: 1, 128>}, {transform_indices = @transform_9, window_bounds = array<i64: 8, 128>}]} {
    %c0 = arith.constant 0 : index
    %c0_0 = arith.constant 0 : index
    %0 = vector.load %arg1[%c0, %c0_0] : memref<8x16xf32, #tpu.memory_space<vmem>>, vector<8x16xf32>
    %c0_1 = arith.constant 0 : index
    %c0_2 = arith.constant 0 : index
    %1 = vector.load %arg2[%c0_1, %c0_2] : memref<16x256xf32, #tpu.memory_space<vmem>>, vector<16x256xf32>
    %cst = arith.constant dense<0.000000e+00> : vector<8x256xf32>
    %2 = tpu.matmul %0, %1, %cst {dimension_numbers = #tpu.dot_dimension_numbers<[1], [0], [0], [1], [0, 0, 1, 1], [], []>} : vector<8x16xf32>, vector<16x256xf32>, vector<8x256xf32> -> vector<8x256xf32>
    %c0_3 = arith.constant 0 : index
    %c0_4 = arith.constant 0 : index
    %3 = vector.load %arg3[%c0_3, %c0_4] : memref<1x256xf32, #tpu.memory_space<vmem>>, vector<1x256xf32>
    %4 = vector.broadcast %3 : vector<1x256xf32> to vector<8x256xf32>
    %5 = arith.addf %2, %4 : vector<8x256xf32>
    %cst_5 = arith.constant 0.000000e+00 : f32
    %6 = vector.broadcast %cst_5 : f32 to vector<8x256xf32>
    %7 = arith.maximumf %5, %6 : vector<8x256xf32>
    %c0_6 = arith.constant 0 : index
    %c0_7 = arith.constant 0 : index
    %8 = vector.load %arg4[%c0_6, %c0_7] : memref<256x256xf32, #tpu.memory_space<vmem>>, vector<256x256xf32>
    %cst_8 = arith.constant dense<0.000000e+00> : vector<8x256xf32>
    %9 = tpu.matmul %7, %8, %cst_8 {dimension_numbers = #tpu.dot_dimension_numbers<[1], [0], [0], [1], [0, 0, 1, 1], [], []>} : vector<8x256xf32>, vector<256x256xf32>, vector<8x256xf32> -> vector<8x256xf32>
    %c0_9 = arith.constant 0 : index
    %c0_10 = arith.constant 0 : index
    %10 = vector.load %arg5[%c0_9, %c0_10] : memref<1x256xf32, #tpu.memory_space<vmem>>, vector<1x256xf32>
    %11 = vector.broadcast %10 : vector<1x256xf32> to vector<8x256xf32>
    %12 = arith.addf %9, %11 : vector<8x256xf32>
    %cst_11 = arith.constant 0.000000e+00 : f32
    %13 = vector.broadcast %cst_11 : f32 to vector<8x256xf32>
    %14 = arith.maximumf %12, %13 : vector<8x256xf32>
    %c0_12 = arith.constant 0 : index
    %c0_13 = arith.constant 0 : index
    %15 = vector.load %arg6[%c0_12, %c0_13] : memref<256x128xf32, #tpu.memory_space<vmem>>, vector<256x128xf32>
    %cst_14 = arith.constant dense<0.000000e+00> : vector<8x128xf32>
    %16 = tpu.matmul %14, %15, %cst_14 {dimension_numbers = #tpu.dot_dimension_numbers<[1], [0], [0], [1], [0, 0, 1, 1], [], []>} : vector<8x256xf32>, vector<256x128xf32>, vector<8x128xf32> -> vector<8x128xf32>
    %c0_15 = arith.constant 0 : index
    %c0_16 = arith.constant 0 : index
    %17 = vector.load %arg7[%c0_15, %c0_16] : memref<1x128xf32, #tpu.memory_space<vmem>>, vector<1x128xf32>
    %18 = vector.broadcast %17 : vector<1x128xf32> to vector<8x128xf32>
    %19 = arith.addf %16, %18 : vector<8x128xf32>
    %cst_17 = arith.constant 0.000000e+00 : f32
    %20 = vector.broadcast %cst_17 : f32 to vector<8x128xf32>
    %21 = arith.maximumf %19, %20 : vector<8x128xf32>
    %c0_18 = arith.constant 0 : index
    %c0_19 = arith.constant 0 : index
    %22 = vector.load %arg8[%c0_18, %c0_19] : memref<128x128xf32, #tpu.memory_space<vmem>>, vector<128x128xf32>
    %cst_20 = arith.constant dense<0.000000e+00> : vector<8x128xf32>
    %23 = tpu.matmul %21, %22, %cst_20 {dimension_numbers = #tpu.dot_dimension_numbers<[1], [0], [0], [1], [0, 0, 1, 1], [], []>} : vector<8x128xf32>, vector<128x128xf32>, vector<8x128xf32> -> vector<8x128xf32>
    %c0_21 = arith.constant 0 : index
    %c0_22 = arith.constant 0 : index
    %24 = vector.load %arg9[%c0_21, %c0_22] : memref<1x128xf32, #tpu.memory_space<vmem>>, vector<1x128xf32>
    %25 = vector.broadcast %24 : vector<1x128xf32> to vector<8x128xf32>
    %26 = arith.addf %23, %25 : vector<8x128xf32>
    %c0_23 = arith.constant 0 : index
    %c0_24 = arith.constant 0 : index
    %27 = vector.load %arg10[%c0_23, %c0_24] : memref<8x128xf32, #tpu.memory_space<vmem>>, vector<8x128xf32>
    tpu.vector_store %arg10[%c0_23, %c0_24], %26 {strides = array<i32>} : memref<8x128xf32, #tpu.memory_space<vmem>>, vector<8x128xf32>,
    return
  }
  func.func @transform_0(%arg0: i32) -> (i32, i32) {
    %c0_i32 = arith.constant 0 : i32
    %c0_i32_0 = arith.constant 0 : i32
    return %arg0, %c0_i32 : i32, i32
  }
  func.func @transform_1(%arg0: i32) -> (i32, i32) {
    %c0_i32 = arith.constant 0 : i32
    %c0_i32_0 = arith.constant 0 : i32
    %c0_i32_1 = arith.constant 0 : i32
    return %c0_i32, %c0_i32_0 : i32, i32
  }
  func.func @transform_2(%arg0: i32) -> (i32, i32) {
    %c0_i32 = arith.constant 0 : i32
    %c0_i32_0 = arith.constant 0 : i32
    %c0_i32_1 = arith.constant 0 : i32
    return %c0_i32, %c0_i32_0 : i32, i32
  }
  func.func @transform_3(%arg0: i32) -> (i32, i32) {
    %c0_i32 = arith.constant 0 : i32
    %c0_i32_0 = arith.constant 0 : i32
    %c0_i32_1 = arith.constant 0 : i32
    return %c0_i32, %c0_i32_0 : i32, i32
  }
  func.func @transform_4(%arg0: i32) -> (i32, i32) {
    %c0_i32 = arith.constant 0 : i32
    %c0_i32_0 = arith.constant 0 : i32
    %c0_i32_1 = arith.constant 0 : i32
    return %c0_i32, %c0_i32_0 : i32, i32
  }
  func.func @transform_5(%arg0: i32) -> (i32, i32) {
    %c0_i32 = arith.constant 0 : i32
    %c0_i32_0 = arith.constant 0 : i32
    %c0_i32_1 = arith.constant 0 : i32
    return %c0_i32, %c0_i32_0 : i32, i32
  }
  func.func @transform_6(%arg0: i32) -> (i32, i32) {
    %c0_i32 = arith.constant 0 : i32
    %c0_i32_0 = arith.constant 0 : i32
    %c0_i32_1 = arith.constant 0 : i32
    return %c0_i32, %c0_i32_0 : i32, i32
  }
  func.func @transform_7(%arg0: i32) -> (i32, i32) {
    %c0_i32 = arith.constant 0 : i32
    %c0_i32_0 = arith.constant 0 : i32
    %c0_i32_1 = arith.constant 0 : i32
    return %c0_i32, %c0_i32_0 : i32, i32
  }
  func.func @transform_8(%arg0: i32) -> (i32, i32) {
    %c0_i32 = arith.constant 0 : i32
    %c0_i32_0 = arith.constant 0 : i32
    %c0_i32_1 = arith.constant 0 : i32
    return %c0_i32, %c0_i32_0 : i32, i32
  }
  func.func @transform_9(%arg0: i32) -> (i32, i32) {
    %c0_i32 = arith.constant 0 : i32
    %c0_i32_0 = arith.constant 0 : i32
    return %arg0, %c0_i32 : i32, i32
  }
}

</mosaic_0001>

<llo_original>
// kernel: dqn_forward.1
$region0: #{dqn_forward.1}
  #allocation0 [shape = 'u32[]', space=smem, size = 0x4, offset = 0x4, fixed_abs, tag = 'smem constant byte address 0x4 - core index']
  #allocation1 [shape = 'u32[144,128]{1,0:T(1,128)}', space=vmem, size = 0x12000, scoped, tag = 'internal scratch']
  %s0 = inlined_call_operand.vmem [shape: f32[8,16], index: 0, kind: input, shape index: {}]
  %s1 = inlined_call_operand.vmem [shape: f32[16,256], index: 1, kind: input, shape index: {}]
  %s2 = inlined_call_operand.vmem [shape: f32[1,256], index: 2, kind: input, shape index: {}]
  %s3 = inlined_call_operand.hbm [shape: f32[256,256], index: 3, kind: input, shape index: {}]
  %s4 = inlined_call_operand.vmem [shape: f32[1,256], index: 4, kind: input, shape index: {}]
  %s5 = inlined_call_operand.vmem [shape: f32[256,128], index: 5, kind: input, shape index: {}]
  %s6 = inlined_call_operand.vmem [shape: f32[1,128], index: 6, kind: input, shape index: {}]
  %s7 = inlined_call_operand.vmem [shape: f32[128,128], index: 7, kind: input, shape index: {}]
  %s8 = inlined_call_operand.vmem [shape: f32[1,128], index: 8, kind: input, shape index: {}]
  %s9 = inlined_call_operand.vmem [shape: f32[8,128], index: 9, kind: output, shape index: {}]
  %s10 = sld [smem:[#allocation0]]
  $region50: #{dqn_forward.1} parent=0
    _
  %s12 = ssub.s32 1, %s10
  %s13 = scalar_select 0, %s12, %s10
  $region1: #{dqn_forward.1} parent=0
    #allocation2 [shape = 'u8[262144]{0}', space=vmem, size = 0x40000, scoped, tag = 'input window, operand 3, single buffered']
    #allocation3 [shape = 's32[1]{0}', space=sflag, size = 0x4, scoped, tag = 'scoped memory for dqn_forward.1']
    %14 = vsyncpa [#allocation3], 0
    // Predicated region
    $region2: #{dqn_forward.1} parent=1 // pred_check
      _
    $region3: #{dqn_forward.1} parent=1 // pred_check_branch
      %16 = sbr.rel (0) target = $region5
    $region4: #{dqn_forward.1} parent=1 // pred_region
      _
    $region5: #{dqn_forward.1} parent=1 // pred_fallthru
      _
    // Predicated region
    $region6: #{dqn_forward.1} parent=1 // pred_check
      _
    $region7: #{dqn_forward.1} parent=1 // pred_check_branch
      %18 = sbr.rel (0) target = $region9
    $region8: #{dqn_forward.1} parent=1 // pred_region
      _
    $region9: #{dqn_forward.1} parent=1 // pred_fallthru
      _
    // Predicated region
    $region10: #{dqn_forward.1} parent=1 // pred_check
      _
    $region11: #{dqn_forward.1} parent=1 // pred_check_branch
      %20 = sbr.rel (0) target = $region13
    $region12: #{dqn_forward.1} parent=1 // pred_region
      _
    $region13: #{dqn_forward.1} parent=1 // pred_fallthru
      _
    // Predicated region
    $region14: #{dqn_forward.1} parent=1 // pred_check
      _
    $region15: #{dqn_forward.1} parent=1 // pred_check_branch
      %22 = sbr.rel (0) target = $region17
    $region16: #{dqn_forward.1} parent=1 // pred_region
      %s24 = ssub.s32 8192, 8192
      %25 = vsyncadd [#allocation3], %s24
      %s26 = sshll.u32 [#allocation2], 4
      %s27 = int_to_ptr.vmem [resolvable:$true] %s26
      %32 = dma.hbm_to_vmem [thread:$0]  %s3, 8192, %s27, [#allocation3], 256, 256, 16
    $region17: #{dqn_forward.1} parent=1 // pred_fallthru
      _
    // Predicated region
    $region18: #{dqn_forward.1} parent=1 // pred_check
      _
    $region19: #{dqn_forward.1} parent=1 // pred_check_branch
      %34 = sbr.rel (0) target = $region21
    $region20: #{dqn_forward.1} parent=1 // pred_region
      _
    $region21: #{dqn_forward.1} parent=1 // pred_fallthru
      _
    // Predicated region
    $region22: #{dqn_forward.1} parent=1 // pred_check
      _
    $region23: #{dqn_forward.1} parent=1 // pred_check_branch
      %36 = sbr.rel (0) target = $region25
    $region24: #{dqn_forward.1} parent=1 // pred_region
      _
    $region25: #{dqn_forward.1} parent=1 // pred_fallthru
      _
    // Predicated region
    $region26: #{dqn_forward.1} parent=1 // pred_check
      _
    $region27: #{dqn_forward.1} parent=1 // pred_check_branch
      %38 = sbr.rel (0) target = $region29
    $region28: #{dqn_forward.1} parent=1 // pred_region
      _
    $region29: #{dqn_forward.1} parent=1 // pred_fallthru
      _
    // Predicated region
    $region30: #{dqn_forward.1} parent=1 // pred_check
      _
    $region31: #{dqn_forward.1} parent=1 // pred_check_branch
      %40 = sbr.rel (0) target = $region33
    $region32: #{dqn_forward.1} parent=1 // pred_region
      _
    $region33: #{dqn_forward.1} parent=1 // pred_fallthru
      _
    // Predicated region
    $region34: #{dqn_forward.1} parent=1 // pred_check
      _
    $region35: #{dqn_forward.1} parent=1 // pred_check_branch
      %42 = sbr.rel (0) target = $region37
    $region36: #{dqn_forward.1} parent=1 // pred_region
      _
    $region37: #{dqn_forward.1} parent=1 // pred_fallthru
      _
    // Predicated region
    $region38: #{dqn_forward.1} parent=1 // pred_check
      _
    $region39: #{dqn_forward.1} parent=1 // pred_check_branch
      %44 = sbr.rel (0) target = $region41
    $region40: #{dqn_forward.1} parent=1 // pred_region
      %45 = dma.done [#allocation3], 8192
    $region41: #{dqn_forward.1} parent=1 // pred_fallthru
      _
    %v46 = vld [vmem:[%s0] sm:$0xff]
    %v47 = vld [vmem:[%s1] sm:$0xff]
    %v48 = vld [vmem:[%s1 + $0x8] sm:$0xff]
    %v49 = vld [vmem:[%s1 + $0x10] sm:$0xff]
    %v50 = vld [vmem:[%s1 + $0x18] sm:$0xff]
    %v51 = vld [vmem:[%s2] sm:$0x3]
    %v53 = vlaneseq
    %v54 = vshrl.u32 %v53, 7
    %v55 = vsub.s32 0, %v54
    %v56 = vrot.slane %v51, %v55
    %v57 = vlaneseq
    %v58 = vshrl.u32 %v57, 7
    %v59 = vsub.s32 1, %v58
    %v60 = vrot.slane %v51, %v59
    %vm63 = vcmask 130048
    %v65 = vsel %vm63, %v46, 0
    %67 = vmatprep.subr.mxu0 %v48
    %68 = vmatpush1.msra.mxu0 %v47
    %69 = vmatprep.subr.mxu0 %v50
    %70 = vmatpush1.msra.mxu0 %v49
    %71 = vmatprep.subr.mxu0 0.0
    %72 = vmatpush1.msra.mxu0 0.0
    %73 = vmatprep.subr.mxu0 0.0
    %74 = vmatpush1.msra.mxu0 0.0
    %75 = vmatprep.subr.mxu0 0.0
    %76 = vmatpush1.msra.mxu0 0.0
    %77 = vmatprep.subr.mxu0 0.0
    %78 = vmatpush1.msra.mxu0 0.0
    %79 = vmatprep.subr.mxu0 0.0
    %80 = vmatpush1.msra.mxu0 0.0
    %81 = vmatprep.subr.mxu0 0.0
    %82 = vmatpush1.msra.mxu0 0.0
    %83 = vmatprep.subr.mxu0 0.0
    %84 = vmatpush1.msra.mxu0 0.0
    %85 = vmatprep.subr.mxu0 0.0
    %86 = vmatpush1.msra.mxu0 0.0
    %87 = vmatprep.subr.mxu0 0.0
    %88 = vmatpush1.msra.mxu0 0.0
    %89 = vmatprep.subr.mxu0 0.0
    %90 = vmatpush1.msra.mxu0 0.0
    %91 = vmatprep.subr.mxu0 0.0
    %92 = vmatpush1.msra.mxu0 0.0
    %93 = vmatprep.subr.mxu0 0.0
    %94 = vmatpush1.msra.mxu0 0.0
    %95 = vmatprep.subr.mxu0 0.0
    %96 = vmatpush1.msra.mxu0 0.0
    %97 = vmatprep.subr.mxu0 0.0
    %98 = vmatpush1.msra.mxu0 0.0
    %99 = vmatprep.subr.mxu0 0.0
    %100 = vmatpush1.msra.mxu0 0.0
    %101 = vmatprep.subr.mxu0 0.0
    %102 = vmatpush1.msra.mxu0 0.0
    %103 = vmatprep.subr.mxu0 0.0
    %104 = vmatpush1.msra.mxu0 0.0
    %105 = vmatprep.subr.mxu0 0.0
    %106 = vmatpush1.msra.mxu0 0.0
    %107 = vmatprep.subr.mxu0 0.0
    %108 = vmatpush1.msra.mxu0 0.0
    %109 = vmatprep.subr.mxu0 0.0
    %110 = vmatpush1.msra.mxu0 0.0
    %111 = vmatprep.subr.mxu0 0.0
    %112 = vmatpush1.msra.mxu0 0.0
    %113 = vmatprep.subr.mxu0 0.0
    %114 = vmatpush1.msra.mxu0 0.0
    %115 = vmatprep.subr.mxu0 0.0
    %116 = vmatpush1.msra.mxu0 0.0
    %117 = vmatprep.subr.mxu0 0.0
    %118 = vmatpush1.msra.mxu0 0.0
    %119 = vmatprep.subr.mxu0 0.0
    %120 = vmatpush1.msra.mxu0 0.0
    %121 = vmatprep.subr.mxu0 0.0
    %122 = vmatpush1.msra.mxu0 0.0
    %123 = vmatprep.subr.mxu0 0.0
    %124 = vmatpush1.msra.mxu0 0.0
    %125 = vmatprep.subr.mxu0 0.0
    %126 = vmatpush1.msra.mxu0 0.0
    %127 = vmatprep.subr.mxu0 0.0
    %128 = vmatpush1.msra.mxu0 0.0
    %129 = vmatprep.subr.mxu0 0.0
    %130 = vmatpush1.msra.mxu0 0.0
    %131 = vmatprep.mubr.f32.mxu0 0.0
    %132 = vmatmul.mubr.f32.gmra.mrb[0].mxu0 %v65
    %v133 = vpop.f32.mrb[0].mxu0
    %v134 = vadd.f32 %v56, %v133
    %v135 = vpop.f32.mrb[0].mxu0
    %v136 = vadd.f32 %v60, %v135
    %137 = vdwg.mxu0
    %v138 = vmax.f32 %v134, 0.0
    %v139 = vmax.f32 %v136, 0.0
    %v140 = vld [vmem:[#allocation2] sm:$0xff]
    %v141 = vld [vmem:[#allocation2 + $0x8] sm:$0xff]
    %v142 = vld [vmem:[#allocation2 + $0x10] sm:$0xff]
    %v143 = vld [vmem:[#allocation2 + $0x18] sm:$0xff]
    %v144 = vld [vmem:[#allocation2 + $0x20] sm:$0xff]
    %v145 = vld [vmem:[#allocation2 + $0x28] sm:$0xff]
    %v146 = vld [vmem:[#allocation2 + $0x30] sm:$0xff]
    %v147 = vld [vmem:[#allocation2 + $0x38] sm:$0xff]
    %v148 = vld [vmem:[#allocation2 + $0x40] sm:$0xff]
    %v149 = vld [vmem:[#allocation2 + $0x48] sm:$0xff]
    %v150 = vld [vmem:[#allocation2 + $0x50] sm:$0xff]
    %v151 = vld [vmem:[#allocation2 + $0x58] sm:$0xff]
    %v152 = vld [vmem:[#allocation2 + $0x60] sm:$0xff]
    %v153 = vld [vmem:[#allocation2 + $0x68] sm:$0xff]
    %v154 = vld [vmem:[#allocation2 + $0x70] sm:$0xff]
    %v155 = vld [vmem:[#allocation2 + $0x78] sm:$0xff]
    %v156 = vld [vmem:[#allocation2 + $0x80] sm:$0xff]
    %v157 = vld [vmem:[#allocation2 + $0x88] sm:$0xff]
    %v158 = vld [vmem:[#allocation2 + $0x90] sm:$0xff]
    %v159 = vld [vmem:[#allocation2 + $0x98] sm:$0xff]
    %v160 = vld [vmem:[#allocation2 + $0xa0] sm:$0xff]
    %v161 = vld [vmem:[#allocation2 + $0xa8] sm:$0xff]
    %v162 = vld [vmem:[#allocation2 + $0xb0] sm:$0xff]
    %v163 = vld [vmem:[#allocation2 + $0xb8] sm:$0xff]
    %v164 = vld [vmem:[#allocation2 + $0xc0] sm:$0xff]
    %v165 = vld [vmem:[#allocation2 + $0xc8] sm:$0xff]
    %v166 = vld [vmem:[#allocation2 + $0xd0] sm:$0xff]
    %v167 = vld [vmem:[#allocation2 + $0xd8] sm:$0xff]
    %v168 = vld [vmem:[#allocation2 + $0xe0] sm:$0xff]
    %v169 = vld [vmem:[#allocation2 + $0xe8] sm:$0xff]
    %v170 = vld [vmem:[#allocation2 + $0xf0] sm:$0xff]
    %v171 = vld [vmem:[#allocation2 + $0xf8] sm:$0xff]
    %v172 = vld [vmem:[#allocation2 + $0x100] sm:$0xff]
    %v173 = vld [vmem:[#allocation2 + $0x108] sm:$0xff]
    %v174 = vld [vmem:[#allocation2 + $0x110] sm:$0xff]
    %v175 = vld [vmem:[#allocation2 + $0x118] sm:$0xff]
    %v176 = vld [vmem:[#allocation2 + $0x120] sm:$0xff]
    %v177 = vld [vmem:[#allocation2 + $0x128] sm:$0xff]
    %v178 = vld [vmem:[#allocation2 + $0x130] sm:$0xff]
    %v179 = vld [vmem:[#allocation2 + $0x138] sm:$0xff]
    %v180 = vld [vmem:[#allocation2 + $0x140] sm:$0xff]
    %v181 = vld [vmem:[#allocation2 + $0x148] sm:$0xff]
    %v182 = vld [vmem:[#allocation2 + $0x150] sm:$0xff]
    %v183 = vld [vmem:[#allocation2 + $0x158] sm:$0xff]
    %v184 = vld [vmem:[#allocation2 + $0x160] sm:$0xff]
    %v185 = vld [vmem:[#allocation2 + $0x168] sm:$0xff]
    %v186 = vld [vmem:[#allocation2 + $0x170] sm:$0xff]
    %v187 = vld [vmem:[#allocation2 + $0x178] sm:$0xff]
    %v188 = vld [vmem:[#allocation2 + $0x180] sm:$0xff]
    %v189 = vld [vmem:[#allocation2 + $0x188] sm:$0xff]
    %v190 = vld [vmem:[#allocation2 + $0x190] sm:$0xff]
    %v191 = vld [vmem:[#allocation2 + $0x198] sm:$0xff]
    %v192 = vld [vmem:[#allocation2 + $0x1a0] sm:$0xff]
    %v193 = vld [vmem:[#allocation2 + $0x1a8] sm:$0xff]
    %v194 = vld [vmem:[#allocation2 + $0x1b0] sm:$0xff]
    %v195 = vld [vmem:[#allocation2 + $0x1b8] sm:$0xff]
    %v196 = vld [vmem:[#allocation2 + $0x1c0] sm:$0xff]
    %v197 = vld [vmem:[#allocation2 + $0x1c8] sm:$0xff]
    %v198 = vld [vmem:[#allocation2 + $0x1d0] sm:$0xff]
    %v199 = vld [vmem:[#allocation2 + $0x1d8] sm:$0xff]
    %v200 = vld [vmem:[#allocation2 + $0x1e0] sm:$0xff]
    %v201 = vld [vmem:[#allocation2 + $0x1e8] sm:$0xff]
    %v202 = vld [vmem:[#allocation2 + $0x1f0] sm:$0xff]
    %v203 = vld [vmem:[#allocation2 + $0x1f8] sm:$0xff]
    %v204 = vld [vmem:[%s4] sm:$0x3]
    %v206 = vlaneseq
    %v207 = vshrl.u32 %v206, 7
    %v208 = vsub.s32 0, %v207
    %v209 = vrot.slane %v204, %v208
    %v210 = vlaneseq
    %v211 = vshrl.u32 %v210, 7
    %v212 = vsub.s32 1, %v211
    %v213 = vrot.slane %v204, %v212
    %216 = vmatprep.subr.mxu0 %v141
    %217 = vmatpush1.msra.mxu0 %v140
    %218 = vmatprep.subr.mxu0 %v143
    %219 = vmatpush1.msra.mxu0 %v142
    %220 = vmatprep.subr.mxu0 %v145
    %221 = vmatpush1.msra.mxu0 %v144
    %222 = vmatprep.subr.mxu0 %v147
    %223 = vmatpush1.msra.mxu0 %v146
    %224 = vmatprep.subr.mxu0 %v149
    %225 = vmatpush1.msra.mxu0 %v148
    %226 = vmatprep.subr.mxu0 %v151
    %227 = vmatpush1.msra.mxu0 %v150
    %228 = vmatprep.subr.mxu0 %v153
    %229 = vmatpush1.msra.mxu0 %v152
    %230 = vmatprep.subr.mxu0 %v155
    %231 = vmatpush1.msra.mxu0 %v154
    %232 = vmatprep.subr.mxu0 %v157
    %233 = vmatpush1.msra.mxu0 %v156
    %234 = vmatprep.subr.mxu0 %v159
    %235 = vmatpush1.msra.mxu0 %v158
    %236 = vmatprep.subr.mxu0 %v161
    %237 = vmatpush1.msra.mxu0 %v160
    %238 = vmatprep.subr.mxu0 %v163
    %239 = vmatpush1.msra.mxu0 %v162
    %240 = vmatprep.subr.mxu0 %v165
    %241 = vmatpush1.msra.mxu0 %v164
    %242 = vmatprep.subr.mxu0 %v167
    %243 = vmatpush1.msra.mxu0 %v166
    %244 = vmatprep.subr.mxu0 %v169
    %245 = vmatpush1.msra.mxu0 %v168
    %246 = vmatprep.subr.mxu0 %v171
    %247 = vmatpush1.msra.mxu0 %v170
    %248 = vmatprep.subr.mxu0 %v173
    %249 = vmatpush1.msra.mxu0 %v172
    %250 = vmatprep.subr.mxu0 %v175
    %251 = vmatpush1.msra.mxu0 %v174
    %252 = vmatprep.subr.mxu0 %v177
    %253 = vmatpush1.msra.mxu0 %v176
    %254 = vmatprep.subr.mxu0 %v179
    %255 = vmatpush1.msra.mxu0 %v178
    %256 = vmatprep.subr.mxu0 %v181
    %257 = vmatpush1.msra.mxu0 %v180
    %258 = vmatprep.subr.mxu0 %v183
    %259 = vmatpush1.msra.mxu0 %v182
    %260 = vmatprep.subr.mxu0 %v185
    %261 = vmatpush1.msra.mxu0 %v184
    %262 = vmatprep.subr.mxu0 %v187
    %263 = vmatpush1.msra.mxu0 %v186
    %264 = vmatprep.subr.mxu0 %v189
    %265 = vmatpush1.msra.mxu0 %v188
    %266 = vmatprep.subr.mxu0 %v191
    %267 = vmatpush1.msra.mxu0 %v190
    %268 = vmatprep.subr.mxu0 %v193
    %269 = vmatpush1.msra.mxu0 %v192
    %270 = vmatprep.subr.mxu0 %v195
    %271 = vmatpush1.msra.mxu0 %v194
    %272 = vmatprep.subr.mxu0 %v197
    %273 = vmatpush1.msra.mxu0 %v196
    %274 = vmatprep.subr.mxu0 %v199
    %275 = vmatpush1.msra.mxu0 %v198
    %276 = vmatprep.subr.mxu0 %v201
    %277 = vmatpush1.msra.mxu0 %v200
    %278 = vmatprep.subr.mxu0 %v203
    %279 = vmatpush1.msra.mxu0 %v202
    %280 = vmatprep.mubr.f32.mxu0 %v139
    %281 = vmatmul.mubr.f32.gmra.mrb[0].mxu0 %v138
    %v282 = vpop.f32.mrb[0].mxu0
    %v283 = vadd.f32 %v209, %v282
    %v284 = vpop.f32.mrb[0].mxu0
    %v285 = vadd.f32 %v213, %v284
    %286 = vdwg.mxu0
    %v287 = vmax.f32 %v283, 0.0
    %v288 = vmax.f32 %v285, 0.0
    %v289 = vld [vmem:[%s5] sm:$0xff]
    %v290 = vld [vmem:[%s5 + $0x8] sm:$0xff]
    %v291 = vld [vmem:[%s5 + $0x10] sm:$0xff]
    %v292 = vld [vmem:[%s5 + $0x18] sm:$0xff]
    %v293 = vld [vmem:[%s5 + $0x20] sm:$0xff]
    %v294 = vld [vmem:[%s5 + $0x28] sm:$0xff]
    %v295 = vld [vmem:[%s5 + $0x30] sm:$0xff]
    %v296 = vld [vmem:[%s5 + $0x38] sm:$0xff]
    %v297 = vld [vmem:[%s5 + $0x40] sm:$0xff]
    %v298 = vld [vmem:[%s5 + $0x48] sm:$0xff]
    %v299 = vld [vmem:[%s5 + $0x50] sm:$0xff]
    %v300 = vld [vmem:[%s5 + $0x58] sm:$0xff]
    %v301 = vld [vmem:[%s5 + $0x60] sm:$0xff]
    %v302 = vld [vmem:[%s5 + $0x68] sm:$0xff]
    %v303 = vld [vmem:[%s5 + $0x70] sm:$0xff]
    %v304 = vld [vmem:[%s5 + $0x78] sm:$0xff]
    %v305 = vld [vmem:[%s5 + $0x80] sm:$0xff]
    %v306 = vld [vmem:[%s5 + $0x88] sm:$0xff]
    %v307 = vld [vmem:[%s5 + $0x90] sm:$0xff]
    %v308 = vld [vmem:[%s5 + $0x98] sm:$0xff]
    %v309 = vld [vmem:[%s5 + $0xa0] sm:$0xff]
    %v310 = vld [vmem:[%s5 + $0xa8] sm:$0xff]
    %v311 = vld [vmem:[%s5 + $0xb0] sm:$0xff]
    %v312 = vld [vmem:[%s5 + $0xb8] sm:$0xff]
    %v313 = vld [vmem:[%s5 + $0xc0] sm:$0xff]
    %v314 = vld [vmem:[%s5 + $0xc8] sm:$0xff]
    %v315 = vld [vmem:[%s5 + $0xd0] sm:$0xff]
    %v316 = vld [vmem:[%s5 + $0xd8] sm:$0xff]
    %v317 = vld [vmem:[%s5 + $0xe0] sm:$0xff]
    %v318 = vld [vmem:[%s5 + $0xe8] sm:$0xff]
    %v319 = vld [vmem:[%s5 + $0xf0] sm:$0xff]
    %v320 = vld [vmem:[%s5 + $0xf8] sm:$0xff]
    %v321 = vld [vmem:[%s6] sm:$0x1]
    %v323 = vlaneseq
    %v324 = vshrl.u32 %v323, 7
    %v325 = vsub.s32 0, %v324
    %v326 = vrot.slane %v321, %v325
    %328 = vmatprep.subr.mxu0 0.0
    %329 = vmatpush1.msra.mxu0 %v289
    %330 = vmatprep.subr.mxu0 0.0
    %331 = vmatpush1.msra.mxu0 %v290
    %332 = vmatprep.subr.mxu0 0.0
    %333 = vmatpush1.msra.mxu0 %v291
    %334 = vmatprep.subr.mxu0 0.0
    %335 = vmatpush1.msra.mxu0 %v292
    %336 = vmatprep.subr.mxu0 0.0
    %337 = vmatpush1.msra.mxu0 %v293
    %338 = vmatprep.subr.mxu0 0.0
    %339 = vmatpush1.msra.mxu0 %v294
    %340 = vmatprep.subr.mxu0 0.0
    %341 = vmatpush1.msra.mxu0 %v295
    %342 = vmatprep.subr.mxu0 0.0
    %343 = vmatpush1.msra.mxu0 %v296
    %344 = vmatprep.subr.mxu0 0.0
    %345 = vmatpush1.msra.mxu0 %v297
    %346 = vmatprep.subr.mxu0 0.0
    %347 = vmatpush1.msra.mxu0 %v298
    %348 = vmatprep.subr.mxu0 0.0
    %349 = vmatpush1.msra.mxu0 %v299
    %350 = vmatprep.subr.mxu0 0.0
    %351 = vmatpush1.msra.mxu0 %v300
    %352 = vmatprep.subr.mxu0 0.0
    %353 = vmatpush1.msra.mxu0 %v301
    %354 = vmatprep.subr.mxu0 0.0
    %355 = vmatpush1.msra.mxu0 %v302
    %356 = vmatprep.subr.mxu0 0.0
    %357 = vmatpush1.msra.mxu0 %v303
    %358 = vmatprep.subr.mxu0 0.0
    %359 = vmatpush1.msra.mxu0 %v304
    %360 = vmatprep.subr.mxu0 0.0
    %361 = vmatpush1.msra.mxu0 %v305
    %362 = vmatprep.subr.mxu0 0.0
    %363 = vmatpush1.msra.mxu0 %v306
    %364 = vmatprep.subr.mxu0 0.0
    %365 = vmatpush1.msra.mxu0 %v307
    %366 = vmatprep.subr.mxu0 0.0
    %367 = vmatpush1.msra.mxu0 %v308
    %368 = vmatprep.subr.mxu0 0.0
    %369 = vmatpush1.msra.mxu0 %v309
    %370 = vmatprep.subr.mxu0 0.0
    %371 = vmatpush1.msra.mxu0 %v310
    %372 = vmatprep.subr.mxu0 0.0
    %373 = vmatpush1.msra.mxu0 %v311
    %374 = vmatprep.subr.mxu0 0.0
    %375 = vmatpush1.msra.mxu0 %v312
    %376 = vmatprep.subr.mxu0 0.0
    %377 = vmatpush1.msra.mxu0 %v313
    %378 = vmatprep.subr.mxu0 0.0
    %379 = vmatpush1.msra.mxu0 %v314
    %380 = vmatprep.subr.mxu0 0.0
    %381 = vmatpush1.msra.mxu0 %v315
    %382 = vmatprep.subr.mxu0 0.0
    %383 = vmatpush1.msra.mxu0 %v316
    %384 = vmatprep.subr.mxu0 0.0
    %385 = vmatpush1.msra.mxu0 %v317
    %386 = vmatprep.subr.mxu0 0.0
    %387 = vmatpush1.msra.mxu0 %v318
    %388 = vmatprep.subr.mxu0 0.0
    %389 = vmatpush1.msra.mxu0 %v319
    %390 = vmatprep.subr.mxu0 0.0
    %391 = vmatpush1.msra.mxu0 %v320
    %392 = vmatprep.mubr.f32.mxu0 %v288
    %393 = vmatmul.mubr.f32.gmra.mrb[0].mxu0 %v287
    %v394 = vpop.f32.mrb[0].mxu0
    %v395 = vadd.f32 %v326, %v394
    %v396 = vpop.f32.mrb[0].mxu0
    %397 = vdwg.mxu0
    %v398 = vmax.f32 %v395, 0.0
    %v399 = vld [vmem:[%s7] sm:$0xff]
    %v400 = vld [vmem:[%s7 + $0x8] sm:$0xff]
    %v401 = vld [vmem:[%s7 + $0x10] sm:$0xff]
    %v402 = vld [vmem:[%s7 + $0x18] sm:$0xff]
    %v403 = vld [vmem:[%s7 + $0x20] sm:$0xff]
    %v404 = vld [vmem:[%s7 + $0x28] sm:$0xff]
    %v405 = vld [vmem:[%s7 + $0x30] sm:$0xff]
    %v406 = vld [vmem:[%s7 + $0x38] sm:$0xff]
    %v407 = vld [vmem:[%s7 + $0x40] sm:$0xff]
    %v408 = vld [vmem:[%s7 + $0x48] sm:$0xff]
    %v409 = vld [vmem:[%s7 + $0x50] sm:$0xff]
    %v410 = vld [vmem:[%s7 + $0x58] sm:$0xff]
    %v411 = vld [vmem:[%s7 + $0x60] sm:$0xff]
    %v412 = vld [vmem:[%s7 + $0x68] sm:$0xff]
    %v413 = vld [vmem:[%s7 + $0x70] sm:$0xff]
    %v414 = vld [vmem:[%s7 + $0x78] sm:$0xff]
    %v415 = vld [vmem:[%s8] sm:$0x1]
    %v417 = vlaneseq
    %v418 = vshrl.u32 %v417, 7
    %v419 = vsub.s32 0, %v418
    %v420 = vrot.slane %v415, %v419
    %422 = vmatprep.subr.mxu0 0.0
    %423 = vmatpush1.msra.mxu0 %v399
    %424 = vmatprep.subr.mxu0 0.0
    %425 = vmatpush1.msra.mxu0 %v400
    %426 = vmatprep.subr.mxu0 0.0
    %427 = vmatpush1.msra.mxu0 %v401
    %428 = vmatprep.subr.mxu0 0.0
    %429 = vmatpush1.msra.mxu0 %v402
    %430 = vmatprep.subr.mxu0 0.0
    %431 = vmatpush1.msra.mxu0 %v403
    %432 = vmatprep.subr.mxu0 0.0
    %433 = vmatpush1.msra.mxu0 %v404
    %434 = vmatprep.subr.mxu0 0.0
    %435 = vmatpush1.msra.mxu0 %v405
    %436 = vmatprep.subr.mxu0 0.0
    %437 = vmatpush1.msra.mxu0 %v406
    %438 = vmatprep.subr.mxu0 0.0
    %439 = vmatpush1.msra.mxu0 %v407
    %440 = vmatprep.subr.mxu0 0.0
    %441 = vmatpush1.msra.mxu0 %v408
    %442 = vmatprep.subr.mxu0 0.0
    %443 = vmatpush1.msra.mxu0 %v409
    %444 = vmatprep.subr.mxu0 0.0
    %445 = vmatpush1.msra.mxu0 %v410
    %446 = vmatprep.subr.mxu0 0.0
    %447 = vmatpush1.msra.mxu0 %v411
    %448 = vmatprep.subr.mxu0 0.0
    %449 = vmatpush1.msra.mxu0 %v412
    %450 = vmatprep.subr.mxu0 0.0
    %451 = vmatpush1.msra.mxu0 %v413
    %452 = vmatprep.subr.mxu0 0.0
    %453 = vmatpush1.msra.mxu0 %v414
    %454 = vmatprep.subr.mxu0 0.0
    %455 = vmatpush1.msra.mxu0 0.0
    %456 = vmatprep.subr.mxu0 0.0
    %457 = vmatpush1.msra.mxu0 0.0
    %458 = vmatprep.subr.mxu0 0.0
    %459 = vmatpush1.msra.mxu0 0.0
    %460 = vmatprep.subr.mxu0 0.0
    %461 = vmatpush1.msra.mxu0 0.0
    %462 = vmatprep.subr.mxu0 0.0
    %463 = vmatpush1.msra.mxu0 0.0
    %464 = vmatprep.subr.mxu0 0.0
    %465 = vmatpush1.msra.mxu0 0.0
    %466 = vmatprep.subr.mxu0 0.0
    %467 = vmatpush1.msra.mxu0 0.0
    %468 = vmatprep.subr.mxu0 0.0
    %469 = vmatpush1.msra.mxu0 0.0
    %470 = vmatprep.subr.mxu0 0.0
    %471 = vmatpush1.msra.mxu0 0.0
    %472 = vmatprep.subr.mxu0 0.0
    %473 = vmatpush1.msra.mxu0 0.0
    %474 = vmatprep.subr.mxu0 0.0
    %475 = vmatpush1.msra.mxu0 0.0
    %476 = vmatprep.subr.mxu0 0.0
    %477 = vmatpush1.msra.mxu0 0.0
    %478 = vmatprep.subr.mxu0 0.0
    %479 = vmatpush1.msra.mxu0 0.0
    %480 = vmatprep.subr.mxu0 0.0
    %481 = vmatpush1.msra.mxu0 0.0
    %482 = vmatprep.subr.mxu0 0.0
    %483 = vmatpush1.msra.mxu0 0.0
    %484 = vmatprep.subr.mxu0 0.0
    %485 = vmatpush1.msra.mxu0 0.0
    %486 = vmatprep.mubr.f32.mxu0 0.0
    %487 = vmatmul.mubr.f32.gmra.mrb[0].mxu0 %v398
    %v488 = vpop.f32.mrb[0].mxu0
    %v489 = vadd.f32 %v420, %v488
    %v490 = vpop.f32.mrb[0].mxu0
    %491 = vdwg.mxu0
    %492 = vst [vmem:[%s9] sm:$0xff] %v489
    // Predicated region
    $region42: #{dqn_forward.1} parent=1 // pred_check
      _
    $region43: #{dqn_forward.1} parent=1 // pred_check_branch
      %494 = sbr.rel (0) target = $region45
    $region44: #{dqn_forward.1} parent=1 // pred_region
      _
    $region45: #{dqn_forward.1} parent=1 // pred_fallthru
      _
    // Predicated region
    $region46: #{dqn_forward.1} parent=1 // pred_check
      _
    $region47: #{dqn_forward.1} parent=1 // pred_check_branch
      %496 = sbr.rel (0) target = $region49
    $region48: #{dqn_forward.1} parent=1 // pred_region
      _
    $region49: #{dqn_forward.1} parent=1 // pred_fallthru
      _
    %497 = vsyncpa [#allocation3], 1

</llo_original>
